<compile_context>
chip_gen: v7x
topology: tpu7x:2x2x1
jax: 0.10.0
libtpu: 0.0.40
codegen_flags: <defaults>
</compile_context>

<pallas_src>
import functools

import jax
import jax.numpy as jnp
from jax.experimental import pallas as pl
from jax.experimental.pallas import tpu as pltpu

# ---------------------------------------------------------------------------
# Padé [4/4] coefficients of cos(x) around 0 (what mpmath.pade(taylor(cos), 4, 4)
# returns; computed analytically so no mpmath dependency is needed):
#   P(x) = 1 - (115/252) x^2 + (313/15120) x^4
#   Q(x) = 1 + ( 11/252) x^2 + ( 13/15120) x^4
# Constant-term-first lists below match the PyTorch buffers; the kernel uses
# the even-polynomial form directly.
# ---------------------------------------------------------------------------
P_COEFFS = (1.0, 0.0, -115.0 / 252.0, 0.0, 313.0 / 15120.0)
Q_COEFFS = (1.0, 0.0, 11.0 / 252.0, 0.0, 13.0 / 15120.0)

_P2 = -115.0 / 252.0
_P4 = 313.0 / 15120.0
_Q2 = 11.0 / 252.0
_Q4 = 13.0 / 15120.0

_LANES = 128


def pade_cosine_kernel(x_ref, o_ref):
    # NOTE: the reference computes `x2.clamp(-1+1e-6, 1-1e-6)` but never uses
    # the clamped value (dead code) — the output only depends on the two
    # polynomial evaluations, so it is intentionally omitted here.
    x = x_ref[...].astype(jnp.float32)
    x2 = x * x
    num = 1.0 + x2 * (_P2 + x2 * _P4)
    den = 1.0 + x2 * (_Q2 + x2 * _Q4)
    # Q(x) >= 1 for all real x, so exact division is safe; keep it exact so
    # results match the 1e-6 tolerance (pl.reciprocal(approx=True) would not).
    o_ref[...] = (num / den).astype(o_ref.dtype)


@functools.partial(jax.jit, static_argnames=("row_tile",))
def pade_cosine(x, row_tile=1024):
    """Elementwise Padé [4/4] cosine approximation via a Pallas TPU kernel."""
    orig_shape = x.shape
    orig_dtype = x.dtype
    total = x.size

    # --- flatten into a lane-dense [rows, 128] slab -------------------------
    x_flat = jnp.ravel(x)
    padded_total = ((total + _LANES - 1) // _LANES) * _LANES
    needs_lane_pad = padded_total != total
    if needs_lane_pad:
        # Only for sizes not a multiple of 128 (not the case for typical NCHW
        # activations); pad/slice are full HBM copies so we gate them.
        x_flat = jnp.pad(x_flat, (0, padded_total - total))
    rows = padded_total // _LANES
    x2d = x_flat.reshape(rows, _LANES)

    # --- pick block / grid --------------------------------------------------
    if rows <= row_tile:
        # Single block covering the whole array: one grid step, and a block
        # equal to the full array dims is exempt from the (8,128) constraint.
        block_rows = rows
        grid = (1,)
    else:
        # Ragged last block (if any) is handled by Pallas via masked edge
        # writes — no row padding needed.
        block_rows = row_tile
        grid = (pl.cdiv(rows, row_tile),)

    out2d = pl.pallas_call(
        pade_cosine_kernel,
        out_shape=jax.ShapeDtypeStruct((rows, _LANES), orig_dtype),
        grid_spec=pltpu.PrefetchScalarGridSpec(
            num_scalar_prefetch=0,
            grid=grid,
            in_specs=[pl.BlockSpec((block_rows, _LANES), lambda i: (i, 0))],
            out_specs=pl.BlockSpec((block_rows, _LANES), lambda i: (i, 0)),
        ),
        compiler_params=pltpu.CompilerParams(
            dimension_semantics=("parallel",),
        ),
    )(x2d)

    out_flat = out2d.reshape(padded_total)
    if needs_lane_pad:
        out_flat = out_flat[:total]
    return out_flat.reshape(orig_shape)


def pade_cosine_ref(x):
    """Pure-JAX reference mirroring the PyTorch forward (full Horner)."""
    def horner(x, coeffs):
        result = jnp.zeros_like(x)
        for c in reversed(coeffs):
            result = result * x + jnp.asarray(c, dtype=x.dtype)
        return result

    num = horner(x, P_COEFFS)
    den = horner(x, Q_COEFFS)
    return num / den


if __name__ == "__main__":
    key = jax.random.PRNGKey(0)
    # Small NCHW-like input consistent with typical module usage.
    x = jax.random.uniform(
        key, (2, 4, 16, 16), dtype=jnp.float32, minval=-1.0, maxval=1.0
    )

    out = pade_cosine(x)
    out = jax.block_until_ready(out)

    ref = pade_cosine_ref(x)
    assert out.shape == x.shape and out.dtype == x.dtype
    assert jnp.allclose(out, ref, atol=1e-6, rtol=1e-6), "mismatch vs reference"
    # Sanity: Padé [4/4] of cos is very accurate on [-1, 1].
    assert jnp.max(jnp.abs(out - jnp.cos(x))) < 1e-5

    # Also exercise the multi-tile (ragged-grid) path with a larger input.
    x_big = jax.random.uniform(
        jax.random.PRNGKey(1), (8, 4, 144, 128), dtype=jnp.float32,
        minval=-1.0, maxval=1.0,
    )
    out_big = jax.block_until_ready(pade_cosine(x_big, row_tile=1024))
    assert jnp.allclose(out_big, pade_cosine_ref(x_big), atol=1e-6, rtol=1e-6)

    print("KERNEL_OK")
</pallas_src>

<mosaic_0001>
module attributes {stable_mosaic.version = 11 : i64} {
  func.func @pade_cosine_kernel(%arg0: i32, %arg1: memref<16x128xf32, #tpu.memory_space<vmem>>, %arg2: memref<16x128xf32, #tpu.memory_space<vmem>>) attributes {dimension_semantics = [#tpu.dimension_semantics<parallel>], iteration_bounds = array<i64: 1>, scalar_prefetch = 0 : i64, scratch_operands = 0 : i64, tpu.core_type = #tpu.core_type<tc>, window_params = [{transform_indices = @transform_0, window_bounds = array<i64: 16, 128>}, {transform_indices = @transform_1, window_bounds = array<i64: 16, 128>}]} {
    %c0 = arith.constant 0 : index
    %c0_0 = arith.constant 0 : index
    %0 = vector.load %arg1[%c0, %c0_0] : memref<16x128xf32, #tpu.memory_space<vmem>>, vector<16x128xf32>
    %1 = arith.mulf %0, %0 : vector<16x128xf32>
    %cst = arith.constant 0.0207010582 : f32
    %2 = vector.broadcast %cst : f32 to vector<16x128xf32>
    %3 = arith.mulf %1, %2 : vector<16x128xf32>
    %cst_1 = arith.constant -0.456349194 : f32
    %4 = vector.broadcast %cst_1 : f32 to vector<16x128xf32>
    %5 = arith.addf %4, %3 : vector<16x128xf32>
    %6 = arith.mulf %1, %5 : vector<16x128xf32>
    %cst_2 = arith.constant 1.000000e+00 : f32
    %7 = vector.broadcast %cst_2 : f32 to vector<16x128xf32>
    %8 = arith.addf %7, %6 : vector<16x128xf32>
    %cst_3 = arith.constant 8.59788386E-4 : f32
    %9 = vector.broadcast %cst_3 : f32 to vector<16x128xf32>
    %10 = arith.mulf %1, %9 : vector<16x128xf32>
    %cst_4 = arith.constant 0.0436507948 : f32
    %11 = vector.broadcast %cst_4 : f32 to vector<16x128xf32>
    %12 = arith.addf %11, %10 : vector<16x128xf32>
    %13 = arith.mulf %1, %12 : vector<16x128xf32>
    %cst_5 = arith.constant 1.000000e+00 : f32
    %14 = vector.broadcast %cst_5 : f32 to vector<16x128xf32>
    %15 = arith.addf %14, %13 : vector<16x128xf32>
    %16 = arith.divf %8, %15 : vector<16x128xf32>
    %c0_6 = arith.constant 0 : index
    %c0_7 = arith.constant 0 : index
    %17 = vector.load %arg2[%c0_6, %c0_7] : memref<16x128xf32, #tpu.memory_space<vmem>>, vector<16x128xf32>
    tpu.vector_store %arg2[%c0_6, %c0_7], %16 {strides = array<i32>} : memref<16x128xf32, #tpu.memory_space<vmem>>, vector<16x128xf32>,
    return
  }
  func.func @transform_0(%arg0: i32) -> (i32, i32) {
    %c0_i32 = arith.constant 0 : i32
    %c0_i32_0 = arith.constant 0 : i32
    return %arg0, %c0_i32 : i32, i32
  }
  func.func @transform_1(%arg0: i32) -> (i32, i32) {
    %c0_i32 = arith.constant 0 : i32
    %c0_i32_0 = arith.constant 0 : i32
    return %arg0, %c0_i32 : i32, i32
  }
}

</mosaic_0001>

<llo_original>
// kernel: pade_cosine.1
$region0: #{pade_cosine.1}
  #allocation0 [shape = 'u32[]', space=smem, size = 0x4, offset = 0x4, fixed_abs, tag = 'smem constant byte address 0x4 - core index']
  #allocation1 [shape = 'u32[144,128]{1,0:T(1,128)}', space=vmem, size = 0x12000, scoped, tag = 'internal scratch']
  %s0 = inlined_call_operand.vmem [shape: f32[16,128], index: 0, kind: input, shape index: {}]
  %s1 = inlined_call_operand.vmem [shape: f32[16,128], index: 1, kind: output, shape index: {}]
  %s2 = sld [smem:[#allocation0]]
  $region14: #{pade_cosine.1} parent=0
    _
  %s4 = ssub.s32 1, %s2
  %s5 = scalar_select 0, %s4, %s2
  // Predicated region
  $region2: #{pade_cosine.1} parent=0 // pred_check
    _
  $region3: #{pade_cosine.1} parent=0 // pred_check_branch
    %7 = sbr.rel (0) target = $region5
  $region4: #{pade_cosine.1} parent=0 // pred_region
    _
  $region5: #{pade_cosine.1} parent=0 // pred_fallthru
    _
  %v8 = vld [vmem:[%s0] sm:$0xff]
  %v9 = vld [vmem:[%s0 + $0x8] sm:$0xff]
  %v10 = vmul.f32 %v8, %v8
  %v11 = vmul.f32 %v9, %v9
  %v12 = vmul.f32 %v10, 0.020701058
  %v13 = vmul.f32 %v11, 0.020701058
  %v14 = vadd.f32 %v12, -0.4563492
  %v15 = vadd.f32 %v13, -0.4563492
  %v16 = vmul.f32 %v10, %v14
  %v17 = vmul.f32 %v11, %v15
  %v18 = vadd.f32 %v16, 1.0
  %v19 = vadd.f32 %v17, 1.0
  %v20 = vmul.f32 %v10, 0.0008597884
  %v21 = vmul.f32 %v11, 0.0008597884
  %v22 = vadd.f32 %v20, 0.043650795
  %v23 = vadd.f32 %v21, 0.043650795
  %v24 = vmul.f32 %v10, %v22
  %v25 = vmul.f32 %v11, %v23
  %v26 = vadd.f32 %v24, 1.0
  %v27 = vadd.f32 %v25, 1.0
  %v28 = vrcp.pop %v26
  %v29 = vmul.f32 %v18, %v28
  %v30 = vrcp.pop %v27
  %v31 = vmul.f32 %v19, %v30
  %32 = vst [vmem:[%s1] sm:$0xff] %v29
  %33 = vst [vmem:[%s1 + $0x8] sm:$0xff] %v31
  // Predicated region
  $region6: #{pade_cosine.1} parent=0 // pred_check
    _
  $region7: #{pade_cosine.1} parent=0 // pred_check_branch
    %35 = sbr.rel (0) target = $region9
  $region8: #{pade_cosine.1} parent=0 // pred_region
    _
  $region9: #{pade_cosine.1} parent=0 // pred_fallthru
    _
  // Predicated region
  $region10: #{pade_cosine.1} parent=0 // pred_check
    _
  $region11: #{pade_cosine.1} parent=0 // pred_check_branch
    %37 = sbr.rel (0) target = $region13
  $region12: #{pade_cosine.1} parent=0 // pred_region
    _
  $region13: #{pade_cosine.1} parent=0 // pred_fallthru
    _

</llo_original>
